<compile_context>
chip_gen: v6e
topology: v6e:2x2x1
jax: 0.10.0
libtpu: 0.0.40
codegen_flags: <defaults>
</compile_context>

<pallas_src>
import functools

import jax
import jax.numpy as jnp
from jax.experimental import pallas as pl
from jax.experimental.pallas import tpu as pltpu

N_FEATURES = 3   # ['day', 'month', 'menu_encoded']
H1 = 64
H2 = 32
OUT = 1


def _round_up(n, m):
    return ((n + m - 1) // m) * m


def mlp_kernel(x_ref, w1t_ref, b1_ref, w2t_ref, b2_ref, w3_ref, b3_ref, o_ref):
    """Fused 3-layer MLP forward for one lane-dense batch tile.

    x_ref:  (3,  tb)   transposed inputs (batch on lanes)
    w1t_ref:(64, 3)    fc1 weight, transposed to (out, in)
    b1_ref: (64, 1)
    w2t_ref:(32, 64)   fc2 weight, transposed to (out, in)
    b2_ref: (32, 1)
    w3_ref: (32, 1)    out weight in (in, out) form (used for reduce)
    b3_ref: (1, 1)
    o_ref:  (1,  tb)   transposed output (lane-dense)
    """
    x = x_ref[...]                                   # (3, tb)
    w1t = w1t_ref[...]                               # (64, 3)

    # --- Layer 1 on the VPU: 3 broadcast FMAs (avoids a K=3 MXU matmul). ---
    h1 = (w1t[:, 0:1] * x[0:1, :]
          + w1t[:, 1:2] * x[1:2, :]
          + w1t[:, 2:3] * x[2:3, :]
          + b1_ref[...])                             # (64, tb)
    h1 = jnp.maximum(h1, 0.0)

    # --- Layer 2 on the MXU: (32, 64) @ (64, tb). ---
    h2 = jnp.dot(w2t_ref[...], h1,
                 preferred_element_type=jnp.float32) + b2_ref[...]
    h2 = jnp.maximum(h2, 0.0)                        # (32, tb)

    # --- Output layer: broadcast multiply + sublane reduce (avoids N=1 matmul). ---
    y = jnp.sum(w3_ref[...] * h2, axis=0, keepdims=True) + b3_ref[...]  # (1, tb)
    o_ref[...] = y.astype(o_ref.dtype)


@functools.partial(jax.jit, static_argnames=("tb",))
def ann_forward(x, params, *, tb=512):
    """x: (B, 3) float32; params: dict of weights/biases. Returns (B, 1)."""
    w1, b1, w2, b2, w3, b3 = (params["w1"], params["b1"], params["w2"],
                              params["b2"], params["w3"], params["b3"])
    B = x.shape[0]

    # Effective batch tile: multiple of 128 lanes, no bigger than needed.
    tb_eff = _round_up(min(tb, _round_up(B, 128)), 128)
    Bp = _round_up(B, tb_eff)

    # Lane-dense transposed layout; zero-pad the batch to the tile.
    xT = x.T                                          # (3, B)
    if Bp != B:
        xT = jnp.pad(xT, ((0, 0), (0, Bp - B)))       # (3, Bp)

    # Weights reshaped for the transposed kernel layout.
    w1t = w1.T                                        # (64, 3)
    b1c = b1.reshape(H1, 1)                           # (64, 1)
    w2t = w2.T                                        # (32, 64)
    b2c = b2.reshape(H2, 1)                           # (32, 1)
    w3c = w3.reshape(H2, OUT)                         # (32, 1)
    b3c = b3.reshape(1, 1)                            # (1, 1)

    grid = (Bp // tb_eff,)
    full = lambda shape: pl.BlockSpec(shape, lambda i: (0, 0))

    yT = pl.pallas_call(
        mlp_kernel,
        out_shape=jax.ShapeDtypeStruct((1, Bp), jnp.float32),
        grid_spec=pltpu.PrefetchScalarGridSpec(
            num_scalar_prefetch=0,
            grid=grid,
            in_specs=[
                pl.BlockSpec((N_FEATURES, tb_eff), lambda i: (0, i)),  # xT tile
                full((H1, N_FEATURES)), full((H1, 1)),                 # fc1
                full((H2, H1)), full((H2, 1)),                         # fc2
                full((H2, OUT)), full((1, 1)),                         # out
            ],
            out_specs=pl.BlockSpec((1, tb_eff), lambda i: (0, i)),
        ),
        compiler_params=pltpu.CompilerParams(
            dimension_semantics=("parallel",)),
    )(xT, w1t, b1c, w2t, b2c, w3c, b3c)

    return yT[:, :B].T                                # (B, 1)


def init_params(key):
    """Deterministic init mimicking PyTorch's default nn.Linear init
    (uniform(-1/sqrt(fan_in), 1/sqrt(fan_in)) for both weight and bias).
    Weights stored as (in, out), biases as (1, out)."""
    def linear(key, fan_in, fan_out):
        kw, kb = jax.random.split(key)
        bound = 1.0 / jnp.sqrt(float(fan_in))
        w = jax.random.uniform(kw, (fan_in, fan_out), jnp.float32, -bound, bound)
        b = jax.random.uniform(kb, (1, fan_out), jnp.float32, -bound, bound)
        return w, b

    k1, k2, k3 = jax.random.split(key, 3)
    w1, b1 = linear(k1, N_FEATURES, H1)
    w2, b2 = linear(k2, H1, H2)
    w3, b3 = linear(k3, H2, OUT)
    return {"w1": w1, "b1": b1, "w2": w2, "b2": b2, "w3": w3, "b3": b3}


def reference_forward(x, p):
    h1 = jnp.maximum(x @ p["w1"] + p["b1"], 0.0)
    h2 = jnp.maximum(h1 @ p["w2"] + p["b2"], 0.0)
    return h2 @ p["w3"] + p["b3"]


if __name__ == "__main__":
    key = jax.random.PRNGKey(0)
    kparam, kx = jax.random.split(key)

    params = init_params(kparam)

    B = 16  # small batch; NOT a multiple of 128 -> exercises the padding path
    # features: day in [1,31], month in [1,12], menu_encoded in [0,9]
    day = jax.random.randint(kx, (B, 1), 1, 32).astype(jnp.float32)
    month = jax.random.randint(jax.random.fold_in(kx, 1), (B, 1), 1, 13).astype(jnp.float32)
    menu = jax.random.randint(jax.random.fold_in(kx, 2), (B, 1), 0, 10).astype(jnp.float32)
    x = jnp.concatenate([day, month, menu], axis=1)  # (B, 3)

    y = ann_forward(x, params)
    jax.block_until_ready(y)

    y_ref = reference_forward(x, params)
    assert y.shape == (B, 1)
    assert jnp.allclose(y, y_ref, atol=1e-4, rtol=1e-4), "mismatch vs reference"

    print("KERNEL_OK")
</pallas_src>

<mosaic_0001>
module attributes {stable_mosaic.version = 11 : i64} {
  func.func @mlp_kernel(%arg0: i32, %arg1: memref<3x128xf32, #tpu.memory_space<vmem>>, %arg2: memref<64x3xf32, #tpu.memory_space<vmem>>, %arg3: memref<64x1xf32, #tpu.memory_space<vmem>>, %arg4: memref<32x64xf32, #tpu.memory_space<vmem>>, %arg5: memref<32x1xf32, #tpu.memory_space<vmem>>, %arg6: memref<32x1xf32, #tpu.memory_space<vmem>>, %arg7: memref<1x1xf32, #tpu.memory_space<vmem>>, %arg8: memref<1x128xf32, #tpu.memory_space<vmem>>) attributes {dimension_semantics = [#tpu.dimension_semantics<parallel>], iteration_bounds = array<i64: 1>, scalar_prefetch = 0 : i64, scratch_operands = 0 : i64, tpu.core_type = #tpu.core_type<tc>, window_params = [{transform_indices = @transform_0, window_bounds = array<i64: 3, 128>}, {pipeline_mode = #tpu.pipeline_mode<synchronous>, transform_indices = @transform_1, window_bounds = array<i64: 64, 3>}, {pipeline_mode = #tpu.pipeline_mode<synchronous>, transform_indices = @transform_2, window_bounds = array<i64: 64, 1>}, {pipeline_mode = #tpu.pipeline_mode<synchronous>, transform_indices = @transform_3, window_bounds = array<i64: 32, 64>}, {pipeline_mode = #tpu.pipeline_mode<synchronous>, transform_indices = @transform_4, window_bounds = array<i64: 32, 1>}, {pipeline_mode = #tpu.pipeline_mode<synchronous>, transform_indices = @transform_5, window_bounds = array<i64: 32, 1>}, {pipeline_mode = #tpu.pipeline_mode<synchronous>, transform_indices = @transform_6, window_bounds = array<i64: 1, 1>}, {transform_indices = @transform_7, window_bounds = array<i64: 1, 128>}]} {
    %c0 = arith.constant 0 : index
    %c0_0 = arith.constant 0 : index
    %0 = vector.load %arg1[%c0, %c0_0] : memref<3x128xf32, #tpu.memory_space<vmem>>, vector<3x128xf32>
    %c0_1 = arith.constant 0 : index
    %c0_2 = arith.constant 0 : index
    %1 = vector.load %arg2[%c0_1, %c0_2] : memref<64x3xf32, #tpu.memory_space<vmem>>, vector<64x3xf32>
    %2 = vector.extract_strided_slice %1 {offsets = [0, 0], sizes = [64, 1], strides = [1, 1]} : vector<64x3xf32> to vector<64x1xf32>
    %3 = vector.extract_strided_slice %0 {offsets = [0, 0], sizes = [1, 128], strides = [1, 1]} : vector<3x128xf32> to vector<1x128xf32>
    %4 = vector.broadcast %2 : vector<64x1xf32> to vector<64x128xf32>
    %5 = vector.broadcast %3 : vector<1x128xf32> to vector<64x128xf32>
    %6 = arith.mulf %4, %5 : vector<64x128xf32>
    %7 = vector.extract_strided_slice %1 {offsets = [0, 1], sizes = [64, 1], strides = [1, 1]} : vector<64x3xf32> to vector<64x1xf32>
    %8 = vector.extract_strided_slice %0 {offsets = [1, 0], sizes = [1, 128], strides = [1, 1]} : vector<3x128xf32> to vector<1x128xf32>
    %9 = vector.broadcast %7 : vector<64x1xf32> to vector<64x128xf32>
    %10 = vector.broadcast %8 : vector<1x128xf32> to vector<64x128xf32>
    %11 = arith.mulf %9, %10 : vector<64x128xf32>
    %12 = arith.addf %6, %11 : vector<64x128xf32>
    %13 = vector.extract_strided_slice %1 {offsets = [0, 2], sizes = [64, 1], strides = [1, 1]} : vector<64x3xf32> to vector<64x1xf32>
    %14 = vector.extract_strided_slice %0 {offsets = [2, 0], sizes = [1, 128], strides = [1, 1]} : vector<3x128xf32> to vector<1x128xf32>
    %15 = vector.broadcast %13 : vector<64x1xf32> to vector<64x128xf32>
    %16 = vector.broadcast %14 : vector<1x128xf32> to vector<64x128xf32>
    %17 = arith.mulf %15, %16 : vector<64x128xf32>
    %18 = arith.addf %12, %17 : vector<64x128xf32>
    %c0_3 = arith.constant 0 : index
    %c0_4 = arith.constant 0 : index
    %19 = vector.load %arg3[%c0_3, %c0_4] : memref<64x1xf32, #tpu.memory_space<vmem>>, vector<64x1xf32>
    %20 = vector.broadcast %19 : vector<64x1xf32> to vector<64x128xf32>
    %21 = arith.addf %18, %20 : vector<64x128xf32>
    %cst = arith.constant 0.000000e+00 : f32
    %22 = vector.broadcast %cst : f32 to vector<64x128xf32>
    %23 = arith.maximumf %21, %22 : vector<64x128xf32>
    %c0_5 = arith.constant 0 : index
    %c0_6 = arith.constant 0 : index
    %24 = vector.load %arg4[%c0_5, %c0_6] : memref<32x64xf32, #tpu.memory_space<vmem>>, vector<32x64xf32>
    %cst_7 = arith.constant dense<0.000000e+00> : vector<32x128xf32>
    %25 = tpu.matmul %24, %23, %cst_7 {dimension_numbers = #tpu.dot_dimension_numbers<[1], [0], [0], [1], [0, 0, 1, 1], [], []>} : vector<32x64xf32>, vector<64x128xf32>, vector<32x128xf32> -> vector<32x128xf32>
    %c0_8 = arith.constant 0 : index
    %c0_9 = arith.constant 0 : index
    %26 = vector.load %arg5[%c0_8, %c0_9] : memref<32x1xf32, #tpu.memory_space<vmem>>, vector<32x1xf32>
    %27 = vector.broadcast %26 : vector<32x1xf32> to vector<32x128xf32>
    %28 = arith.addf %25, %27 : vector<32x128xf32>
    %cst_10 = arith.constant 0.000000e+00 : f32
    %29 = vector.broadcast %cst_10 : f32 to vector<32x128xf32>
    %30 = arith.maximumf %28, %29 : vector<32x128xf32>
    %c0_11 = arith.constant 0 : index
    %c0_12 = arith.constant 0 : index
    %31 = vector.load %arg6[%c0_11, %c0_12] : memref<32x1xf32, #tpu.memory_space<vmem>>, vector<32x1xf32>
    %32 = vector.broadcast %31 : vector<32x1xf32> to vector<32x128xf32>
    %33 = arith.mulf %32, %30 : vector<32x128xf32>
    %cst_13 = arith.constant dense<0.000000e+00> : vector<128xf32>
    %34 = vector.multi_reduction <add>, %33, %cst_13 [0] : vector<32x128xf32> to vector<128xf32>
    %35 = vector.shape_cast %34 : vector<128xf32> to vector<1x128xf32>
    %c0_14 = arith.constant 0 : index
    %c0_15 = arith.constant 0 : index
    %36 = vector.load %arg7[%c0_14, %c0_15] : memref<1x1xf32, #tpu.memory_space<vmem>>, vector<1x1xf32>
    %37 = vector.broadcast %36 : vector<1x1xf32> to vector<1x128xf32>
    %38 = arith.addf %35, %37 : vector<1x128xf32>
    %c0_16 = arith.constant 0 : index
    %c0_17 = arith.constant 0 : index
    %39 = vector.load %arg8[%c0_16, %c0_17] : memref<1x128xf32, #tpu.memory_space<vmem>>, vector<1x128xf32>
    tpu.vector_store %arg8[%c0_16, %c0_17], %38 {strides = array<i32>} : memref<1x128xf32, #tpu.memory_space<vmem>>, vector<1x128xf32>,
    return
  }
  func.func @transform_0(%arg0: i32) -> (i32, i32) {
    %c0_i32 = arith.constant 0 : i32
    %c0_i32_0 = arith.constant 0 : i32
    return %c0_i32, %arg0 : i32, i32
  }
  func.func @transform_1(%arg0: i32) -> (i32, i32) {
    %c0_i32 = arith.constant 0 : i32
    %c0_i32_0 = arith.constant 0 : i32
    %c0_i32_1 = arith.constant 0 : i32
    return %c0_i32, %c0_i32_0 : i32, i32
  }
  func.func @transform_2(%arg0: i32) -> (i32, i32) {
    %c0_i32 = arith.constant 0 : i32
    %c0_i32_0 = arith.constant 0 : i32
    %c0_i32_1 = arith.constant 0 : i32
    return %c0_i32, %c0_i32_0 : i32, i32
  }
  func.func @transform_3(%arg0: i32) -> (i32, i32) {
    %c0_i32 = arith.constant 0 : i32
    %c0_i32_0 = arith.constant 0 : i32
    %c0_i32_1 = arith.constant 0 : i32
    return %c0_i32, %c0_i32_0 : i32, i32
  }
  func.func @transform_4(%arg0: i32) -> (i32, i32) {
    %c0_i32 = arith.constant 0 : i32
    %c0_i32_0 = arith.constant 0 : i32
    %c0_i32_1 = arith.constant 0 : i32
    return %c0_i32, %c0_i32_0 : i32, i32
  }
  func.func @transform_5(%arg0: i32) -> (i32, i32) {
    %c0_i32 = arith.constant 0 : i32
    %c0_i32_0 = arith.constant 0 : i32
    %c0_i32_1 = arith.constant 0 : i32
    return %c0_i32, %c0_i32_0 : i32, i32
  }
  func.func @transform_6(%arg0: i32) -> (i32, i32) {
    %c0_i32 = arith.constant 0 : i32
    %c0_i32_0 = arith.constant 0 : i32
    %c0_i32_1 = arith.constant 0 : i32
    return %c0_i32, %c0_i32_0 : i32, i32
  }
  func.func @transform_7(%arg0: i32) -> (i32, i32) {
    %c0_i32 = arith.constant 0 : i32
    %c0_i32_0 = arith.constant 0 : i32
    return %c0_i32, %arg0 : i32, i32
  }
}

</mosaic_0001>

<llo_original>
// kernel: ann_forward.1
$region0: #{ann_forward.1}
  #allocation0 [shape = 'u32[]', space=smem, size = 0x4, offset = 0x4, fixed_abs, tag = 'smem constant byte address 0x4 - core index']
  #allocation1 [shape = 'u32[144,128]{1,0:T(1,128)}', space=vmem, size = 0x12000, scoped, tag = 'internal scratch']
  #allocation2 [shape = 'f32[1,1]{1,0:T(1,128)S(1)}', space=vmem, size = 0x200, scoped, tag = 'scoped memory for ann_forward.1']
  %s0 = inlined_call_operand.vmem [shape: f32[3,128], index: 0, kind: input, shape index: {}]
  %s1 = inlined_call_operand.vmem [shape: f32[64,3], index: 1, kind: input, shape index: {}]
  %s2 = inlined_call_operand.vmem [shape: f32[64,1], index: 2, kind: input, shape index: {}]
  %s3 = inlined_call_operand.vmem [shape: f32[32,64], index: 3, kind: input, shape index: {}]
  %s4 = inlined_call_operand.vmem [shape: f32[32,1], index: 4, kind: input, shape index: {}]
  %s5 = inlined_call_operand.vmem [shape: f32[32,1], index: 5, kind: input, shape index: {}]
  %s6 = inlined_call_operand.<no memory space> [shape: f32[1,1], index: 6, kind: input, shape index: {}]
  %s7 = inlined_call_operand.vmem [shape: f32[1,128], index: 7, kind: output, shape index: {}]
  %s8 = sld [smem:[#allocation0]]
  $region38: #{ann_forward.1} parent=0
    _
  %s10 = ssub.s32 1, %s8
  %s11 = scalar_select 0, %s10, %s8
  %v12 = vstv %s6
  %13 = vst [vmem:[#allocation2] sm:$0x1] %v12
  // Predicated region
  $region2: #{ann_forward.1} parent=0 // pred_check
    _
  $region3: #{ann_forward.1} parent=0 // pred_check_branch
    %15 = sbr.rel (0) target = $region5
  $region4: #{ann_forward.1} parent=0 // pred_region
    _
  $region5: #{ann_forward.1} parent=0 // pred_fallthru
    _
  // Predicated region
  $region6: #{ann_forward.1} parent=0 // pred_check
    _
  $region7: #{ann_forward.1} parent=0 // pred_check_branch
    %17 = sbr.rel (0) target = $region9
  $region8: #{ann_forward.1} parent=0 // pred_region
    _
  $region9: #{ann_forward.1} parent=0 // pred_fallthru
    _
  // Predicated region
  $region10: #{ann_forward.1} parent=0 // pred_check
    _
  $region11: #{ann_forward.1} parent=0 // pred_check_branch
    %19 = sbr.rel (0) target = $region13
  $region12: #{ann_forward.1} parent=0 // pred_region
    _
  $region13: #{ann_forward.1} parent=0 // pred_fallthru
    _
  // Predicated region
  $region14: #{ann_forward.1} parent=0 // pred_check
    _
  $region15: #{ann_forward.1} parent=0 // pred_check_branch
    %21 = sbr.rel (0) target = $region17
  $region16: #{ann_forward.1} parent=0 // pred_region
    _
  $region17: #{ann_forward.1} parent=0 // pred_fallthru
    _
  // Predicated region
  $region18: #{ann_forward.1} parent=0 // pred_check
    _
  $region19: #{ann_forward.1} parent=0 // pred_check_branch
    %23 = sbr.rel (0) target = $region21
  $region20: #{ann_forward.1} parent=0 // pred_region
    _
  $region21: #{ann_forward.1} parent=0 // pred_fallthru
    _
  // Predicated region
  $region22: #{ann_forward.1} parent=0 // pred_check
    _
  $region23: #{ann_forward.1} parent=0 // pred_check_branch
    %25 = sbr.rel (0) target = $region25
  $region24: #{ann_forward.1} parent=0 // pred_region
    _
  $region25: #{ann_forward.1} parent=0 // pred_fallthru
    _
  // Predicated region
  $region26: #{ann_forward.1} parent=0 // pred_check
    _
  $region27: #{ann_forward.1} parent=0 // pred_check_branch
    %27 = sbr.rel (0) target = $region29
  $region28: #{ann_forward.1} parent=0 // pred_region
    _
  $region29: #{ann_forward.1} parent=0 // pred_fallthru
    _
  %v28 = vld [vmem:[%s0] sm:$0x7]
  %v29 = vld [vmem:[%s1] sm:$0xff]
  %v30 = vld [vmem:[%s1 + $0x8] sm:$0xff]
  %v31 = vld [vmem:[%s1 + $0x10] sm:$0xff]
  %v32 = vld [vmem:[%s1 + $0x18] sm:$0xff]
  %v33 = vld [vmem:[%s1 + $0x20] sm:$0xff]
  %v34 = vld [vmem:[%s1 + $0x28] sm:$0xff]
  %v35 = vld [vmem:[%s1 + $0x30] sm:$0xff]
  %v36 = vld [vmem:[%s1 + $0x38] sm:$0xff]
  %38 = vset.pattern.permute.xlu0 0
  %39 = vperm.xlu0 %38, %v29
  %v40 = vpop.permute.xlu0 %39
  %43 = vset.pattern.permute.xlu0 0
  %44 = vperm.xlu0 %43, %v30
  %v45 = vpop.permute.xlu0 %44
  %48 = vset.pattern.permute.xlu0 0
  %49 = vperm.xlu0 %48, %v31
  %v50 = vpop.permute.xlu0 %49
  %53 = vset.pattern.permute.xlu0 0
  %54 = vperm.xlu0 %53, %v32
  %v55 = vpop.permute.xlu0 %54
  %58 = vset.pattern.permute.xlu0 0
  %59 = vperm.xlu0 %58, %v33
  %v60 = vpop.permute.xlu0 %59
  %63 = vset.pattern.permute.xlu0 0
  %64 = vperm.xlu0 %63, %v34
  %v65 = vpop.permute.xlu0 %64
  %68 = vset.pattern.permute.xlu0 0
  %69 = vperm.xlu0 %68, %v35
  %v70 = vpop.permute.xlu0 %69
  %73 = vset.pattern.permute.xlu0 0
  %74 = vperm.xlu0 %73, %v36
  %v75 = vpop.permute.xlu0 %74
  %v77 = vlaneseq
  %v78 = vshrl.u32 %v77, 7
  %v79 = vsub.s32 0, %v78
  %v80 = vrot.slane %v28, %v79
  %v81 = vmul.f32 %v40, %v80
  %v82 = vmul.f32 %v45, %v80
  %v83 = vmul.f32 %v50, %v80
  %v84 = vmul.f32 %v55, %v80
  %v85 = vmul.f32 %v60, %v80
  %v86 = vmul.f32 %v65, %v80
  %v87 = vmul.f32 %v70, %v80
  %v88 = vmul.f32 %v75, %v80
  %89 = vset.pattern.permute.xlu0 1
  %90 = vperm.xlu0 %89, %v29
  %v91 = vpop.permute.xlu0 %90
  %93 = vset.pattern.permute.xlu0 1
  %94 = vperm.xlu0 %93, %v30
  %v95 = vpop.permute.xlu0 %94
  %97 = vset.pattern.permute.xlu0 1
  %98 = vperm.xlu0 %97, %v31
  %v99 = vpop.permute.xlu0 %98
  %101 = vset.pattern.permute.xlu0 1
  %102 = vperm.xlu0 %101, %v32
  %v103 = vpop.permute.xlu0 %102
  %105 = vset.pattern.permute.xlu0 1
  %106 = vperm.xlu0 %105, %v33
  %v107 = vpop.permute.xlu0 %106
  %109 = vset.pattern.permute.xlu0 1
  %110 = vperm.xlu0 %109, %v34
  %v111 = vpop.permute.xlu0 %110
  %113 = vset.pattern.permute.xlu0 1
  %114 = vperm.xlu0 %113, %v35
  %v115 = vpop.permute.xlu0 %114
  %117 = vset.pattern.permute.xlu0 1
  %118 = vperm.xlu0 %117, %v36
  %v119 = vpop.permute.xlu0 %118
  %v121 = vlaneseq
  %v122 = vshrl.u32 %v121, 7
  %v123 = vsub.s32 1, %v122
  %v124 = vrot.slane %v28, %v123
  %v125 = vmul.f32 %v91, %v124
  %v126 = vmul.f32 %v95, %v124
  %v127 = vmul.f32 %v99, %v124
  %v128 = vmul.f32 %v103, %v124
  %v129 = vmul.f32 %v107, %v124
  %v130 = vmul.f32 %v111, %v124
  %v131 = vmul.f32 %v115, %v124
  %v132 = vmul.f32 %v119, %v124
  %v133 = vadd.f32 %v81, %v125
  %v134 = vadd.f32 %v82, %v126
  %v135 = vadd.f32 %v83, %v127
  %v136 = vadd.f32 %v84, %v128
  %v137 = vadd.f32 %v85, %v129
  %v138 = vadd.f32 %v86, %v130
  %v139 = vadd.f32 %v87, %v131
  %v140 = vadd.f32 %v88, %v132
  %141 = vset.pattern.permute.xlu0 2
  %142 = vperm.xlu0 %141, %v29
  %v143 = vpop.permute.xlu0 %142
  %145 = vset.pattern.permute.xlu0 2
  %146 = vperm.xlu0 %145, %v30
  %v147 = vpop.permute.xlu0 %146
  %149 = vset.pattern.permute.xlu0 2
  %150 = vperm.xlu0 %149, %v31
  %v151 = vpop.permute.xlu0 %150
  %153 = vset.pattern.permute.xlu0 2
  %154 = vperm.xlu0 %153, %v32
  %v155 = vpop.permute.xlu0 %154
  %157 = vset.pattern.permute.xlu0 2
  %158 = vperm.xlu0 %157, %v33
  %v159 = vpop.permute.xlu0 %158
  %161 = vset.pattern.permute.xlu0 2
  %162 = vperm.xlu0 %161, %v34
  %v163 = vpop.permute.xlu0 %162
  %165 = vset.pattern.permute.xlu0 2
  %166 = vperm.xlu0 %165, %v35
  %v167 = vpop.permute.xlu0 %166
  %169 = vset.pattern.permute.xlu0 2
  %170 = vperm.xlu0 %169, %v36
  %v171 = vpop.permute.xlu0 %170
  %v173 = vlaneseq
  %v174 = vshrl.u32 %v173, 7
  %v175 = vsub.s32 2, %v174
  %v176 = vrot.slane %v28, %v175
  %v177 = vmul.f32 %v143, %v176
  %v178 = vmul.f32 %v147, %v176
  %v179 = vmul.f32 %v151, %v176
  %v180 = vmul.f32 %v155, %v176
  %v181 = vmul.f32 %v159, %v176
  %v182 = vmul.f32 %v163, %v176
  %v183 = vmul.f32 %v167, %v176
  %v184 = vmul.f32 %v171, %v176
  %v185 = vadd.f32 %v133, %v177
  %v186 = vadd.f32 %v134, %v178
  %v187 = vadd.f32 %v135, %v179
  %v188 = vadd.f32 %v136, %v180
  %v189 = vadd.f32 %v137, %v181
  %v190 = vadd.f32 %v138, %v182
  %v191 = vadd.f32 %v139, %v183
  %v192 = vadd.f32 %v140, %v184
  %v193 = vld [vmem:[%s2] sm:$0xff]
  %v194 = vld [vmem:[%s2 + $0x8] sm:$0xff]
  %v195 = vld [vmem:[%s2 + $0x10] sm:$0xff]
  %v196 = vld [vmem:[%s2 + $0x18] sm:$0xff]
  %v197 = vld [vmem:[%s2 + $0x20] sm:$0xff]
  %v198 = vld [vmem:[%s2 + $0x28] sm:$0xff]
  %v199 = vld [vmem:[%s2 + $0x30] sm:$0xff]
  %v200 = vld [vmem:[%s2 + $0x38] sm:$0xff]
  %202 = vset.pattern.permute.xlu0 0
  %203 = vperm.xlu0 %202, %v193
  %v204 = vpop.permute.xlu0 %203
  %207 = vset.pattern.permute.xlu0 0
  %208 = vperm.xlu0 %207, %v194
  %v209 = vpop.permute.xlu0 %208
  %212 = vset.pattern.permute.xlu0 0
  %213 = vperm.xlu0 %212, %v195
  %v214 = vpop.permute.xlu0 %213
  %217 = vset.pattern.permute.xlu0 0
  %218 = vperm.xlu0 %217, %v196
  %v219 = vpop.permute.xlu0 %218
  %222 = vset.pattern.permute.xlu0 0
  %223 = vperm.xlu0 %222, %v197
  %v224 = vpop.permute.xlu0 %223
  %227 = vset.pattern.permute.xlu0 0
  %228 = vperm.xlu0 %227, %v198
  %v229 = vpop.permute.xlu0 %228
  %232 = vset.pattern.permute.xlu0 0
  %233 = vperm.xlu0 %232, %v199
  %v234 = vpop.permute.xlu0 %233
  %237 = vset.pattern.permute.xlu0 0
  %238 = vperm.xlu0 %237, %v200
  %v239 = vpop.permute.xlu0 %238
  %v241 = vadd.f32 %v185, %v204
  %v242 = vadd.f32 %v186, %v209
  %v243 = vadd.f32 %v187, %v214
  %v244 = vadd.f32 %v188, %v219
  %v245 = vadd.f32 %v189, %v224
  %v246 = vadd.f32 %v190, %v229
  %v247 = vadd.f32 %v191, %v234
  %v248 = vadd.f32 %v192, %v239
  %v249 = vmax.f32 %v241, 0.0
  %v250 = vmax.f32 %v242, 0.0
  %v251 = vmax.f32 %v243, 0.0
  %v252 = vmax.f32 %v244, 0.0
  %v253 = vmax.f32 %v245, 0.0
  %v254 = vmax.f32 %v246, 0.0
  %v255 = vmax.f32 %v247, 0.0
  %v256 = vmax.f32 %v248, 0.0
  %v257 = vld [vmem:[%s3] sm:$0xff]
  %v258 = vld [vmem:[%s3 + $0x8] sm:$0xff]
  %v259 = vld [vmem:[%s3 + $0x10] sm:$0xff]
  %v260 = vld [vmem:[%s3 + $0x18] sm:$0xff]
  %v261 = vld [vmem:[%s4] sm:$0xff]
  %v262 = vld [vmem:[%s4 + $0x8] sm:$0xff]
  %v263 = vld [vmem:[%s4 + $0x10] sm:$0xff]
  %v264 = vld [vmem:[%s4 + $0x18] sm:$0xff]
  %266 = vset.pattern.permute.xlu0 0
  %267 = vperm.xlu0 %266, %v261
  %v268 = vpop.permute.xlu0 %267
  %271 = vset.pattern.permute.xlu0 0
  %272 = vperm.xlu0 %271, %v262
  %v273 = vpop.permute.xlu0 %272
  %276 = vset.pattern.permute.xlu0 0
  %277 = vperm.xlu0 %276, %v263
  %v278 = vpop.permute.xlu0 %277
  %281 = vset.pattern.permute.xlu0 0
  %282 = vperm.xlu0 %281, %v264
  %v283 = vpop.permute.xlu0 %282
  %vm285 = vcmask 523264
  %v287 = vsel %vm285, %v257, 0
  %v290 = vsel %vm285, %v258, 0
  %v293 = vsel %vm285, %v259, 0
  %v296 = vsel %vm285, %v260, 0
  %298 = vmatprep.subr.mxu0 0.0
  %299 = vmatpush1.msra.mxu0 0.0
  %300 = vmatprep.subr.mxu0 0.0
  %301 = vmatpush1.msra.mxu0 0.0
  %302 = vmatprep.subr.mxu0 0.0
  %303 = vmatpush1.msra.mxu0 0.0
  %304 = vmatprep.subr.mxu0 0.0
  %305 = vmatpush1.msra.mxu0 0.0
  %306 = vmatprep.subr.mxu0 0.0
  %307 = vmatpush1.msra.mxu0 0.0
  %308 = vmatprep.subr.mxu0 0.0
  %309 = vmatpush1.msra.mxu0 0.0
  %310 = vmatprep.subr.mxu0 0.0
  %311 = vmatpush1.msra.mxu0 0.0
  %312 = vmatprep.subr.mxu0 0.0
  %313 = vmatpush1.msra.mxu0 0.0
  %314 = vmatprep.subr.mxu0 0.0
  %315 = vmatpush1.msra.mxu0 %v256
  %316 = vmatprep.subr.mxu0 0.0
  %317 = vmatpush1.msra.mxu0 %v255
  %318 = vmatprep.subr.mxu0 0.0
  %319 = vmatpush1.msra.mxu0 %v254
  %320 = vmatprep.subr.mxu0 0.0
  %321 = vmatpush1.msra.mxu0 %v253
  %322 = vmatprep.subr.mxu0 0.0
  %323 = vmatpush1.msra.mxu0 %v252
  %324 = vmatprep.subr.mxu0 0.0
  %325 = vmatpush1.msra.mxu0 %v251
  %326 = vmatprep.subr.mxu0 0.0
  %327 = vmatpush1.msra.mxu0 %v250
  %328 = vmatprep.subr.mxu0 0.0
  %329 = vmatpush1.msra.mxu0 %v249
  %330 = vmatprep.subr.mxu0 0.0
  %331 = vmatpush2.msra.mxu0 0.0
  %332 = vmatprep.subr.mxu0 0.0
  %333 = vmatpush2.msra.mxu0 0.0
  %334 = vmatprep.subr.mxu0 0.0
  %335 = vmatpush2.msra.mxu0 0.0
  %336 = vmatprep.subr.mxu0 0.0
  %337 = vmatpush2.msra.mxu0 0.0
  %338 = vmatprep.subr.mxu0 0.0
  %339 = vmatpush2.msra.mxu0 0.0
  %340 = vmatprep.subr.mxu0 0.0
  %341 = vmatpush2.msra.mxu0 0.0
  %342 = vmatprep.subr.mxu0 0.0
  %343 = vmatpush2.msra.mxu0 0.0
  %344 = vmatprep.subr.mxu0 0.0
  %345 = vmatpush2.msra.mxu0 0.0
  %346 = vmatprep.subr.mxu0 0.0
  %347 = vmatpush2.msra.mxu0 0.0
  %348 = vmatprep.subr.mxu0 0.0
  %349 = vmatpush2.msra.mxu0 0.0
  %350 = vmatprep.subr.mxu0 0.0
  %351 = vmatpush2.msra.mxu0 0.0
  %352 = vmatprep.subr.mxu0 0.0
  %353 = vmatpush2.msra.mxu0 0.0
  %354 = vmatprep.subr.mxu0 0.0
  %355 = vmatpush2.msra.mxu0 0.0
  %356 = vmatprep.subr.mxu0 0.0
  %357 = vmatpush2.msra.mxu0 0.0
  %358 = vmatprep.subr.mxu0 0.0
  %359 = vmatpush2.msra.mxu0 0.0
  %360 = vmatprep.subr.mxu0 0.0
  %361 = vmatpush2.msra.mxu0 0.0
  %362 = vmatprep.mubr.f32.mxu0 0.0
  %363 = vmatmul.mubr.f32.gmra.mxu0 %v287
  %v364 = vpop.f32.mrf.mxu0
  %v365 = vadd.f32 %v268, %v364
  %v366 = vpop.f32.mrf.mxu0
  %367 = vmatprep.mubr.f32.mxu0 0.0
  %368 = vmatmul.mubr.f32.gmra.mxu0 %v290
  %v369 = vpop.f32.mrf.mxu0
  %v370 = vadd.f32 %v273, %v369
  %v371 = vpop.f32.mrf.mxu0
  %372 = vmatprep.mubr.f32.mxu0 0.0
  %373 = vmatmul.mubr.f32.gmra.mxu0 %v293
  %v374 = vpop.f32.mrf.mxu0
  %v375 = vadd.f32 %v278, %v374
  %v376 = vpop.f32.mrf.mxu0
  %377 = vmatprep.mubr.f32.mxu0 0.0
  %378 = vmatmul.mubr.f32.gmra.mxu0 %v296
  %v379 = vpop.f32.mrf.mxu0
  %v380 = vadd.f32 %v283, %v379
  %v381 = vpop.f32.mrf.mxu0
  %382 = vdwg.mxu0
  %v383 = vmax.f32 %v365, 0.0
  %v384 = vmax.f32 %v370, 0.0
  %v385 = vmax.f32 %v375, 0.0
  %v386 = vmax.f32 %v380, 0.0
  %v387 = vld [vmem:[%s5] sm:$0xff]
  %v388 = vld [vmem:[%s5 + $0x8] sm:$0xff]
  %v389 = vld [vmem:[%s5 + $0x10] sm:$0xff]
  %v390 = vld [vmem:[%s5 + $0x18] sm:$0xff]
  %392 = vset.pattern.permute.xlu0 0
  %393 = vperm.xlu0 %392, %v387
  %v394 = vpop.permute.xlu0 %393
  %397 = vset.pattern.permute.xlu0 0
  %398 = vperm.xlu0 %397, %v388
  %v399 = vpop.permute.xlu0 %398
  %402 = vset.pattern.permute.xlu0 0
  %403 = vperm.xlu0 %402, %v389
  %v404 = vpop.permute.xlu0 %403
  %407 = vset.pattern.permute.xlu0 0
  %408 = vperm.xlu0 %407, %v390
  %v409 = vpop.permute.xlu0 %408
  %v411 = vmul.f32 %v394, %v383
  %v412 = vmul.f32 %v399, %v384
  %v413 = vmul.f32 %v404, %v385
  %v414 = vmul.f32 %v409, %v386
  %v415 = vadd.f32 %v411, %v412
  %v416 = vadd.f32 %v415, %v413
  %v417 = vadd.f32 %v416, %v414
  %v418 = vrot.slane %v417, 4
  %v419 = vadd.f32 %v417, %v418
  %v420 = vrot.slane %v419, 2
  %v421 = vadd.f32 %v419, %v420
  %v422 = vrot.slane %v421, 1
  %v423 = vadd.f32 %v421, %v422
  %v424 = vld [vmem:[#allocation2] sm:$0x1]
  %426 = vset.pattern.permute.xlu0 0
  %427 = vperm.xlu0 %426, %v424
  %v428 = vpop.permute.xlu0 %427
  %v430 = vlaneseq
  %v431 = vshrl.u32 %v430, 7
  %v432 = vsub.s32 0, %v431
  %v433 = vrot.slane %v428, %v432
  %v434 = vadd.f32 %v423, %v433
  %435 = vst [vmem:[%s7] sm:$0x1] %v434
  // Predicated region
  $region30: #{ann_forward.1} parent=0 // pred_check
    _
  $region31: #{ann_forward.1} parent=0 // pred_check_branch
    %437 = sbr.rel (0) target = $region33
  $region32: #{ann_forward.1} parent=0 // pred_region
    _
  $region33: #{ann_forward.1} parent=0 // pred_fallthru
    _
  // Predicated region
  $region34: #{ann_forward.1} parent=0 // pred_check
    _
  $region35: #{ann_forward.1} parent=0 // pred_check_branch
    %439 = sbr.rel (0) target = $region37
  $region36: #{ann_forward.1} parent=0 // pred_region
    _
  $region37: #{ann_forward.1} parent=0 // pred_fallthru
    _

</llo_original>
